<compile_context>
chip_gen: v6e
topology: v6e:2x2x1
jax: 0.10.0
libtpu: 0.0.40
codegen_flags: <defaults>
</compile_context>

<pallas_src>
import functools

import jax
import jax.numpy as jnp
from jax.experimental import pallas as pl
from jax.experimental.pallas import tpu as pltpu


def mlp_kernel(x_ref, w1_ref, b1_ref, w2_ref, b2_ref, o_ref):
    # In-kernel cast of activations to the MXU dtype (no extra HBM pass).
    x = x_ref[...].astype(w1_ref.dtype)
    # Layer 1: MXU matmul (f32 accumulation) + f32 bias-add + ReLU on the VPU.
    h = jnp.dot(x, w1_ref[...], preferred_element_type=jnp.float32)
    h = jnp.maximum(h + b1_ref[...], 0.0)                         # (TB, H_pad) f32
    # Layer 2: cast activations to the MXU dtype, matmul, f32 bias-add.
    out = jnp.dot(h.astype(w2_ref.dtype), w2_ref[...],
                  preferred_element_type=jnp.float32)              # (TB, C_pad)
    o_ref[...] = (out + b2_ref[...]).astype(o_ref.dtype)


def _round_up(x, m):
    return ((x + m - 1) // m) * m


def _cdiv(a, b):
    return -(-a // b)


def _choose_tiling(B, D, H_pad, C_pad, tb):
    """Pick (TB, B_pad) so that TB | B_pad, TB is 16-aligned, padding waste is
    small, VMEM stays under a conservative budget, and moderate batches get
    at least 2 grid steps (so v7x can use both TensorCores)."""
    B16 = _round_up(max(B, 16), 16)

    # Conservative VMEM budget (v5e scoped default is 16 MiB): double-buffered
    # f32 x tile + double-buffered out tile (assume f32 worst case) + f32
    # hidden intermediate + f32 epilogue tile, per row of the batch tile.
    budget = 12 * 1024 * 1024
    bytes_per_row = 2 * (D * 4) + 2 * (C_pad * 4) + H_pad * 4 + C_pad * 4
    tb_cap = max(16, (budget // bytes_per_row) // 16 * 16)
    tb_eff = max(16, min(tb, tb_cap))

    n = _cdiv(B16, tb_eff)
    if n == 1 and B16 >= 256:
        n = 2  # give both v7x TensorCores work for moderate batches
    TB = _round_up(_cdiv(B16, n), 16)
    B_pad = n * TB
    return TB, B_pad


@functools.partial(jax.jit,
                   static_argnames=("tb", "use_bf16", "out_dtype", "trim"))
def mlp_forward(x, w1, b1, w2, b2, *, tb=1024, use_bf16=True,
                out_dtype=jnp.bfloat16, trim=True):
    """Forward pass of the 2-layer MLP.

    x : (B, D) f32
    w1: (D, H) f32, b1: (1, H) f32
    w2: (H, C) f32, b2: (1, C) f32
    returns (B, C) in `out_dtype` if trim else padded (B_pad, C_pad) logits
    (padded class columns are exactly 0).
    """
    B, D = x.shape
    H = w1.shape[1]
    C = w2.shape[1]

    # Lane-dense padded feature dims (multiples of 128).
    H_pad = max(128, _round_up(H, 128))
    C_pad = max(128, _round_up(C, 128))

    TB, B_pad = _choose_tiling(B, D, H_pad, C_pad, tb)

    mm_dtype = jnp.bfloat16 if use_bf16 else jnp.float32

    # x stays in its input dtype (f32): only pad the batch if needed, no cast.
    x_p = x if B_pad == B else jnp.pad(x, ((0, B_pad - B), (0, 0)))

    # Weights are tiny: pad + cast per call is negligible. Biases stay f32
    # for the VPU epilogue. Zero padding is exact (padded hidden units see
    # b1=0 -> ReLU(0)=0 -> multiply zero rows of w2; padded classes get 0).
    w1_p = jnp.pad(w1, ((0, 0), (0, H_pad - H))).astype(mm_dtype)
    b1_p = jnp.pad(b1, ((0, 0), (0, H_pad - H))).astype(jnp.float32)
    w2_p = jnp.pad(w2, ((0, H_pad - H), (0, C_pad - C))).astype(mm_dtype)
    b2_p = jnp.pad(b2, ((0, 0), (0, C_pad - C))).astype(jnp.float32)

    grid = (B_pad // TB,)

    out_p = pl.pallas_call(
        mlp_kernel,
        out_shape=jax.ShapeDtypeStruct((B_pad, C_pad), out_dtype),
        grid=grid,
        in_specs=[
            # Activations: tiled along the batch axis (f32, cast in-kernel).
            pl.BlockSpec((TB, D), lambda i: (i, 0)),
            # Weights / biases: constant index_map -> VMEM-resident.
            pl.BlockSpec((D, H_pad), lambda i: (0, 0)),
            pl.BlockSpec((1, H_pad), lambda i: (0, 0)),
            pl.BlockSpec((H_pad, C_pad), lambda i: (0, 0)),
            pl.BlockSpec((1, C_pad), lambda i: (0, 0)),
        ],
        out_specs=pl.BlockSpec((TB, C_pad), lambda i: (i, 0)),
        compiler_params=pltpu.CompilerParams(
            dimension_semantics=("parallel",),
        ),
    )(x_p, w1_p, b1_p, w2_p, b2_p)

    if not trim:
        return out_p
    # Single cheap post-kernel pass (over a bf16 buffer by default).
    return out_p[:B, :C]


def init_params(key, input_size, hidden, num_classes):
    # Deterministic init mimicking PyTorch nn.Linear default (U(+-1/sqrt(fan_in))).
    k1, k2, k3, k4 = jax.random.split(key, 4)
    bound1 = 1.0 / jnp.sqrt(input_size)
    bound2 = 1.0 / jnp.sqrt(hidden)
    w1 = jax.random.uniform(k1, (input_size, hidden), jnp.float32, -bound1, bound1)
    b1 = jax.random.uniform(k2, (1, hidden), jnp.float32, -bound1, bound1)
    w2 = jax.random.uniform(k3, (hidden, num_classes), jnp.float32, -bound2, bound2)
    b2 = jax.random.uniform(k4, (1, num_classes), jnp.float32, -bound2, bound2)
    return w1, b1, w2, b2


if __name__ == "__main__":
    batch = 8
    input_size = 64
    hidden = 50
    num_classes = 10

    key = jax.random.PRNGKey(0)
    kx, kp = jax.random.split(key)
    x = jax.random.normal(kx, (batch, input_size), jnp.float32)
    w1, b1, w2, b2 = init_params(kp, input_size, hidden, num_classes)

    # Default fast path: bf16 MXU inputs, f32 accumulation, bf16 output.
    out = mlp_forward(x, w1, b1, w2, b2)
    jax.block_until_ready(out)
    assert out.shape == (batch, num_classes)
    assert out.dtype == jnp.bfloat16

    # Reference mirroring the kernel's numerics (bf16 matmul inputs, f32 acc).
    bf = jnp.bfloat16
    h_ref = jnp.maximum(
        jnp.dot(x.astype(bf), w1.astype(bf), preferred_element_type=jnp.float32) + b1,
        0.0)
    ref_bf16 = jnp.dot(h_ref.astype(bf), w2.astype(bf),
                       preferred_element_type=jnp.float32) + b2
    assert jnp.allclose(out.astype(jnp.float32), ref_bf16, atol=2e-2, rtol=2e-2)

    # Looser sanity check against the pure-f32 PyTorch-equivalent math.
    ref_f32 = jnp.maximum(x @ w1 + b1, 0.0) @ w2 + b2
    assert jnp.allclose(out.astype(jnp.float32), ref_f32, atol=7e-2, rtol=7e-2)

    # Exact-parity path (f32 everywhere) against the PyTorch-equivalent math.
    out_f32 = mlp_forward(x, w1, b1, w2, b2, use_bf16=False,
                          out_dtype=jnp.float32)
    jax.block_until_ready(out_f32)
    assert jnp.allclose(out_f32, ref_f32, atol=1e-5, rtol=1e-5)

    print("KERNEL_OK")
</pallas_src>

<mosaic_0001>
module attributes {stable_mosaic.version = 11 : i64} {
  func.func @mlp_kernel(%arg0: i32, %arg1: memref<16x64xf32, #tpu.memory_space<vmem>>, %arg2: memref<64x128xbf16, #tpu.memory_space<vmem>>, %arg3: memref<1x128xf32, #tpu.memory_space<vmem>>, %arg4: memref<128x128xbf16, #tpu.memory_space<vmem>>, %arg5: memref<1x128xf32, #tpu.memory_space<vmem>>, %arg6: memref<16x128xbf16, #tpu.memory_space<vmem>>) attributes {dimension_semantics = [#tpu.dimension_semantics<parallel>], iteration_bounds = array<i64: 1>, scalar_prefetch = 0 : i64, scratch_operands = 0 : i64, tpu.core_type = #tpu.core_type<tc>, window_params = [{transform_indices = @transform_0, window_bounds = array<i64: 16, 64>}, {pipeline_mode = #tpu.pipeline_mode<synchronous>, transform_indices = @transform_1, window_bounds = array<i64: 64, 128>}, {pipeline_mode = #tpu.pipeline_mode<synchronous>, transform_indices = @transform_2, window_bounds = array<i64: 1, 128>}, {pipeline_mode = #tpu.pipeline_mode<synchronous>, transform_indices = @transform_3, window_bounds = array<i64: 128, 128>}, {pipeline_mode = #tpu.pipeline_mode<synchronous>, transform_indices = @transform_4, window_bounds = array<i64: 1, 128>}, {transform_indices = @transform_5, window_bounds = array<i64: 16, 128>}]} {
    %c0 = arith.constant 0 : index
    %c0_0 = arith.constant 0 : index
    %0 = vector.load %arg1[%c0, %c0_0] : memref<16x64xf32, #tpu.memory_space<vmem>>, vector<16x64xf32>
    %1 = arith.truncf %0 : vector<16x64xf32> to vector<16x64xbf16>
    %c0_1 = arith.constant 0 : index
    %c0_2 = arith.constant 0 : index
    %2 = vector.load %arg2[%c0_1, %c0_2] : memref<64x128xbf16, #tpu.memory_space<vmem>>, vector<64x128xbf16>
    %cst = arith.constant dense<0.000000e+00> : vector<16x128xf32>
    %3 = tpu.matmul %1, %2, %cst {dimension_numbers = #tpu.dot_dimension_numbers<[1], [0], [0], [1], [0, 0, 1, 1], [], []>} : vector<16x64xbf16>, vector<64x128xbf16>, vector<16x128xf32> -> vector<16x128xf32>
    %c0_3 = arith.constant 0 : index
    %c0_4 = arith.constant 0 : index
    %4 = vector.load %arg3[%c0_3, %c0_4] : memref<1x128xf32, #tpu.memory_space<vmem>>, vector<1x128xf32>
    %5 = vector.broadcast %4 : vector<1x128xf32> to vector<16x128xf32>
    %6 = arith.addf %3, %5 : vector<16x128xf32>
    %cst_5 = arith.constant 0.000000e+00 : f32
    %7 = vector.broadcast %cst_5 : f32 to vector<16x128xf32>
    %8 = arith.maximumf %6, %7 : vector<16x128xf32>
    %9 = arith.truncf %8 : vector<16x128xf32> to vector<16x128xbf16>
    %c0_6 = arith.constant 0 : index
    %c0_7 = arith.constant 0 : index
    %10 = vector.load %arg4[%c0_6, %c0_7] : memref<128x128xbf16, #tpu.memory_space<vmem>>, vector<128x128xbf16>
    %cst_8 = arith.constant dense<0.000000e+00> : vector<16x128xf32>
    %11 = tpu.matmul %9, %10, %cst_8 {dimension_numbers = #tpu.dot_dimension_numbers<[1], [0], [0], [1], [0, 0, 1, 1], [], []>} : vector<16x128xbf16>, vector<128x128xbf16>, vector<16x128xf32> -> vector<16x128xf32>
    %c0_9 = arith.constant 0 : index
    %c0_10 = arith.constant 0 : index
    %12 = vector.load %arg5[%c0_9, %c0_10] : memref<1x128xf32, #tpu.memory_space<vmem>>, vector<1x128xf32>
    %13 = vector.broadcast %12 : vector<1x128xf32> to vector<16x128xf32>
    %14 = arith.addf %11, %13 : vector<16x128xf32>
    %15 = arith.truncf %14 : vector<16x128xf32> to vector<16x128xbf16>
    %c0_11 = arith.constant 0 : index
    %c0_12 = arith.constant 0 : index
    %16 = vector.load %arg6[%c0_11, %c0_12] : memref<16x128xbf16, #tpu.memory_space<vmem>>, vector<16x128xbf16>
    tpu.vector_store %arg6[%c0_11, %c0_12], %15 {strides = array<i32>} : memref<16x128xbf16, #tpu.memory_space<vmem>>, vector<16x128xbf16>,
    return
  }
  func.func @transform_0(%arg0: i32) -> (i32, i32) {
    %c0_i32 = arith.constant 0 : i32
    %c0_i32_0 = arith.constant 0 : i32
    return %arg0, %c0_i32 : i32, i32
  }
  func.func @transform_1(%arg0: i32) -> (i32, i32) {
    %c0_i32 = arith.constant 0 : i32
    %c0_i32_0 = arith.constant 0 : i32
    %c0_i32_1 = arith.constant 0 : i32
    return %c0_i32, %c0_i32_0 : i32, i32
  }
  func.func @transform_2(%arg0: i32) -> (i32, i32) {
    %c0_i32 = arith.constant 0 : i32
    %c0_i32_0 = arith.constant 0 : i32
    %c0_i32_1 = arith.constant 0 : i32
    return %c0_i32, %c0_i32_0 : i32, i32
  }
  func.func @transform_3(%arg0: i32) -> (i32, i32) {
    %c0_i32 = arith.constant 0 : i32
    %c0_i32_0 = arith.constant 0 : i32
    %c0_i32_1 = arith.constant 0 : i32
    return %c0_i32, %c0_i32_0 : i32, i32
  }
  func.func @transform_4(%arg0: i32) -> (i32, i32) {
    %c0_i32 = arith.constant 0 : i32
    %c0_i32_0 = arith.constant 0 : i32
    %c0_i32_1 = arith.constant 0 : i32
    return %c0_i32, %c0_i32_0 : i32, i32
  }
  func.func @transform_5(%arg0: i32) -> (i32, i32) {
    %c0_i32 = arith.constant 0 : i32
    %c0_i32_0 = arith.constant 0 : i32
    return %arg0, %c0_i32 : i32, i32
  }
}

</mosaic_0001>

<llo_original>
// kernel: mlp_forward.1
$region0: #{mlp_forward.1}
  #allocation0 [shape = 'u32[]', space=smem, size = 0x4, offset = 0x4, fixed_abs, tag = 'smem constant byte address 0x4 - core index']
  #allocation1 [shape = 'u32[144,128]{1,0:T(1,128)}', space=vmem, size = 0x12000, scoped, tag = 'internal scratch']
  %s0 = inlined_call_operand.vmem [shape: f32[16,64], index: 0, kind: input, shape index: {}]
  %s1 = inlined_call_operand.vmem [shape: bf16[64,128], index: 1, kind: input, shape index: {}]
  %s2 = inlined_call_operand.vmem [shape: f32[1,128], index: 2, kind: input, shape index: {}]
  %s3 = inlined_call_operand.vmem [shape: bf16[128,128], index: 3, kind: input, shape index: {}]
  %s4 = inlined_call_operand.vmem [shape: f32[1,128], index: 4, kind: input, shape index: {}]
  %s5 = inlined_call_operand.vmem [shape: bf16[16,128], index: 5, kind: output, shape index: {}]
  %s6 = sld [smem:[#allocation0]]
  $region30: #{mlp_forward.1} parent=0
    _
  %s8 = ssub.s32 1, %s6
  %s9 = scalar_select 0, %s8, %s6
  // Predicated region
  $region2: #{mlp_forward.1} parent=0 // pred_check
    _
  $region3: #{mlp_forward.1} parent=0 // pred_check_branch
    %11 = sbr.rel (0) target = $region5
  $region4: #{mlp_forward.1} parent=0 // pred_region
    _
  $region5: #{mlp_forward.1} parent=0 // pred_fallthru
    _
  // Predicated region
  $region6: #{mlp_forward.1} parent=0 // pred_check
    _
  $region7: #{mlp_forward.1} parent=0 // pred_check_branch
    %13 = sbr.rel (0) target = $region9
  $region8: #{mlp_forward.1} parent=0 // pred_region
    _
  $region9: #{mlp_forward.1} parent=0 // pred_fallthru
    _
  // Predicated region
  $region10: #{mlp_forward.1} parent=0 // pred_check
    _
  $region11: #{mlp_forward.1} parent=0 // pred_check_branch
    %15 = sbr.rel (0) target = $region13
  $region12: #{mlp_forward.1} parent=0 // pred_region
    _
  $region13: #{mlp_forward.1} parent=0 // pred_fallthru
    _
  // Predicated region
  $region14: #{mlp_forward.1} parent=0 // pred_check
    _
  $region15: #{mlp_forward.1} parent=0 // pred_check_branch
    %17 = sbr.rel (0) target = $region17
  $region16: #{mlp_forward.1} parent=0 // pred_region
    _
  $region17: #{mlp_forward.1} parent=0 // pred_fallthru
    _
  // Predicated region
  $region18: #{mlp_forward.1} parent=0 // pred_check
    _
  $region19: #{mlp_forward.1} parent=0 // pred_check_branch
    %19 = sbr.rel (0) target = $region21
  $region20: #{mlp_forward.1} parent=0 // pred_region
    _
  $region21: #{mlp_forward.1} parent=0 // pred_fallthru
    _
  %v21 = vld [vmem:[%s0] sm:$0xff]
  %v22 = vld [vmem:[%s0 + $0x8] sm:$0xff]
  %v23 = vpack.c.bf16 %v22, %v21
  %v24 = vld [vmem:[%s1] sm:$0xf]
  %v25 = vld [vmem:[%s1 + $0x4] sm:$0xf]
  %v26 = vld [vmem:[%s1 + $0x8] sm:$0xf]
  %v27 = vld [vmem:[%s1 + $0xc] sm:$0xf]
  %v28 = vld [vmem:[%s1 + $0x10] sm:$0xf]
  %v29 = vld [vmem:[%s1 + $0x14] sm:$0xf]
  %v30 = vld [vmem:[%s1 + $0x18] sm:$0xf]
  %v31 = vld [vmem:[%s1 + $0x1c] sm:$0xf]
  %v32 = vld [vmem:[%s2] sm:$0x1]
  %v34 = vlaneseq
  %v35 = vshrl.u32 %v34, 7
  %v36 = vsub.s32 0, %v35
  %v37 = vrot.slane %v32, %v36
  %v47 = vunpack.c.l.b16 %v24
  %v48 = vunpack.c.l.b16 %v25
  %v49 = vunpack.c.l.b16 %v26
  %v50 = vunpack.c.l.b16 %v27
  %v51 = vunpack.c.l.b16 %v28
  %v52 = vunpack.c.l.b16 %v29
  %v53 = vunpack.c.l.b16 %v30
  %v54 = vunpack.c.l.b16 %v31
  %v55 = vpack.c.b16 %v48, %v47
  %v56 = vpack.c.b16 %v50, %v49
  %v57 = vpack.c.b16 %v52, %v51
  %v58 = vpack.c.b16 %v54, %v53
  %vm63 = vcmask 523264
  %v65 = vsel %vm63, %v23, 0
  %67 = vmatprep.subr.bf16.mxu0 0
  %68 = vmatpush1.bf16.msra.mxu0 0
  %69 = vmatprep.subr.bf16.mxu0 0
  %70 = vmatpush1.bf16.msra.mxu0 0
  %71 = vmatprep.subr.bf16.mxu0 0
  %72 = vmatpush1.bf16.msra.mxu0 0
  %73 = vmatprep.subr.bf16.mxu0 0
  %74 = vmatpush1.bf16.msra.mxu0 0
  %75 = vmatprep.subr.bf16.mxu0 0
  %76 = vmatpush1.bf16.msra.mxu0 %v58
  %77 = vmatprep.subr.bf16.mxu0 0
  %78 = vmatpush1.bf16.msra.mxu0 %v57
  %79 = vmatprep.subr.bf16.mxu0 0
  %80 = vmatpush1.bf16.msra.mxu0 %v56
  %81 = vmatprep.subr.bf16.mxu0 0
  %82 = vmatpush1.bf16.msra.mxu0 %v55
  %83 = vmatprep.subr.bf16.mxu0 0
  %84 = vmatpush2.bf16.msra.mxu0 0
  %85 = vmatprep.subr.bf16.mxu0 0
  %86 = vmatpush2.bf16.msra.mxu0 0
  %87 = vmatprep.subr.bf16.mxu0 0
  %88 = vmatpush2.bf16.msra.mxu0 0
  %89 = vmatprep.subr.bf16.mxu0 0
  %90 = vmatpush2.bf16.msra.mxu0 0
  %91 = vmatprep.subr.bf16.mxu0 0
  %92 = vmatpush2.bf16.msra.mxu0 0
  %93 = vmatprep.subr.bf16.mxu0 0
  %94 = vmatpush2.bf16.msra.mxu0 0
  %95 = vmatprep.subr.bf16.mxu0 0
  %96 = vmatpush2.bf16.msra.mxu0 0
  %97 = vmatprep.subr.bf16.mxu0 0
  %98 = vmatpush2.bf16.msra.mxu0 0
  %99 = vmatprep.mubr.bf16.mxu0 0
  %100 = vmatmul.mubr.bf16.gmra.mxu0 %v65
  %v101 = vpop.f32.mrf.mxu0
  %v102 = vadd.f32 %v37, %v101
  %v103 = vpop.f32.mrf.mxu0
  %v104 = vpop.f32.mrf.mxu0
  %v105 = vadd.f32 %v37, %v104
  %v106 = vpop.f32.mrf.mxu0
  %107 = vdwg.mxu0
  %v108 = vmax.f32 %v102, 0.0
  %v109 = vmax.f32 %v105, 0.0
  %v110 = vpack.c.bf16 %v109, %v108
  %v111 = vld [vmem:[%s3] sm:$0xf]
  %v112 = vld [vmem:[%s3 + $0x4] sm:$0xf]
  %v113 = vld [vmem:[%s3 + $0x8] sm:$0xf]
  %v114 = vld [vmem:[%s3 + $0xc] sm:$0xf]
  %v115 = vld [vmem:[%s3 + $0x10] sm:$0xf]
  %v116 = vld [vmem:[%s3 + $0x14] sm:$0xf]
  %v117 = vld [vmem:[%s3 + $0x18] sm:$0xf]
  %v118 = vld [vmem:[%s3 + $0x1c] sm:$0xf]
  %v119 = vld [vmem:[%s3 + $0x20] sm:$0xf]
  %v120 = vld [vmem:[%s3 + $0x24] sm:$0xf]
  %v121 = vld [vmem:[%s3 + $0x28] sm:$0xf]
  %v122 = vld [vmem:[%s3 + $0x2c] sm:$0xf]
  %v123 = vld [vmem:[%s3 + $0x30] sm:$0xf]
  %v124 = vld [vmem:[%s3 + $0x34] sm:$0xf]
  %v125 = vld [vmem:[%s3 + $0x38] sm:$0xf]
  %v126 = vld [vmem:[%s3 + $0x3c] sm:$0xf]
  %v127 = vld [vmem:[%s4] sm:$0x1]
  %v129 = vlaneseq
  %v130 = vshrl.u32 %v129, 7
  %v131 = vsub.s32 0, %v130
  %v132 = vrot.slane %v127, %v131
  %v150 = vunpack.c.l.b16 %v111
  %v151 = vunpack.c.l.b16 %v112
  %v152 = vunpack.c.l.b16 %v113
  %v153 = vunpack.c.l.b16 %v114
  %v154 = vunpack.c.l.b16 %v115
  %v155 = vunpack.c.l.b16 %v116
  %v156 = vunpack.c.l.b16 %v117
  %v157 = vunpack.c.l.b16 %v118
  %v158 = vunpack.c.l.b16 %v119
  %v159 = vunpack.c.l.b16 %v120
  %v160 = vunpack.c.l.b16 %v121
  %v161 = vunpack.c.l.b16 %v122
  %v162 = vunpack.c.l.b16 %v123
  %v163 = vunpack.c.l.b16 %v124
  %v164 = vunpack.c.l.b16 %v125
  %v165 = vunpack.c.l.b16 %v126
  %v166 = vpack.c.b16 %v151, %v150
  %v167 = vpack.c.b16 %v153, %v152
  %v168 = vpack.c.b16 %v155, %v154
  %v169 = vpack.c.b16 %v157, %v156
  %v170 = vpack.c.b16 %v159, %v158
  %v171 = vpack.c.b16 %v161, %v160
  %v172 = vpack.c.b16 %v163, %v162
  %v173 = vpack.c.b16 %v165, %v164
  %182 = vmatprep.subr.bf16.mxu0 0
  %183 = vmatpush1.bf16.msra.mxu0 %v173
  %184 = vmatprep.subr.bf16.mxu0 0
  %185 = vmatpush1.bf16.msra.mxu0 %v172
  %186 = vmatprep.subr.bf16.mxu0 0
  %187 = vmatpush1.bf16.msra.mxu0 %v171
  %188 = vmatprep.subr.bf16.mxu0 0
  %189 = vmatpush1.bf16.msra.mxu0 %v170
  %190 = vmatprep.subr.bf16.mxu0 0
  %191 = vmatpush1.bf16.msra.mxu0 %v169
  %192 = vmatprep.subr.bf16.mxu0 0
  %193 = vmatpush1.bf16.msra.mxu0 %v168
  %194 = vmatprep.subr.bf16.mxu0 0
  %195 = vmatpush1.bf16.msra.mxu0 %v167
  %196 = vmatprep.subr.bf16.mxu0 0
  %197 = vmatpush1.bf16.msra.mxu0 %v166
  %198 = vmatprep.subr.bf16.mxu0 0
  %199 = vmatpush2.bf16.msra.mxu0 0
  %200 = vmatprep.subr.bf16.mxu0 0
  %201 = vmatpush2.bf16.msra.mxu0 0
  %202 = vmatprep.subr.bf16.mxu0 0
  %203 = vmatpush2.bf16.msra.mxu0 0
  %204 = vmatprep.subr.bf16.mxu0 0
  %205 = vmatpush2.bf16.msra.mxu0 0
  %206 = vmatprep.subr.bf16.mxu0 0
  %207 = vmatpush2.bf16.msra.mxu0 0
  %208 = vmatprep.subr.bf16.mxu0 0
  %209 = vmatpush2.bf16.msra.mxu0 0
  %210 = vmatprep.subr.bf16.mxu0 0
  %211 = vmatpush2.bf16.msra.mxu0 0
  %212 = vmatprep.subr.bf16.mxu0 0
  %213 = vmatpush2.bf16.msra.mxu0 0
  %214 = vmatprep.mubr.bf16.mxu0 0
  %215 = vmatmul.mubr.bf16.gmra.mxu0 %v110
  %v216 = vpop.f32.mrf.mxu0
  %v217 = vadd.f32 %v132, %v216
  %v218 = vpop.f32.mrf.mxu0
  %v219 = vpop.f32.mrf.mxu0
  %v220 = vadd.f32 %v132, %v219
  %v221 = vpop.f32.mrf.mxu0
  %222 = vdwg.mxu0
  %v223 = vpack.c.bf16 %v220, %v217
  %v225 = vunpack.c.l.b16 %v223
  %v226 = vunpack.c.h.b16 %v223
  %v227 = vpack.c.b16 %v225, %v225
  %v228 = vpack.c.b16 %v226, %v226
  %231 = vst [vmem:[%s5] sm:$0xf] %v227
  %232 = vst [vmem:[%s5 + $0x4] sm:$0xf] %v228
  // Predicated region
  $region22: #{mlp_forward.1} parent=0 // pred_check
    _
  $region23: #{mlp_forward.1} parent=0 // pred_check_branch
    %234 = sbr.rel (0) target = $region25
  $region24: #{mlp_forward.1} parent=0 // pred_region
    _
  $region25: #{mlp_forward.1} parent=0 // pred_fallthru
    _
  // Predicated region
  $region26: #{mlp_forward.1} parent=0 // pred_check
    _
  $region27: #{mlp_forward.1} parent=0 // pred_check_branch
    %236 = sbr.rel (0) target = $region29
  $region28: #{mlp_forward.1} parent=0 // pred_region
    _
  $region29: #{mlp_forward.1} parent=0 // pred_fallthru
    _

</llo_original>
